<compile_context>
chip_gen: v5e
topology: v5e:2x2
jax: 0.10.0
libtpu: 0.0.40
codegen_flags: <defaults>
</compile_context>

<pallas_src>
import numpy as np
import jax
import jax.numpy as jnp
from jax.experimental import pallas as pl
from jax.experimental.pallas import tpu as pltpu


def _round_up(x, m):
    return ((x + m - 1) // m) * m


def _vmem_capacity_bytes():
    try:
        return int(pltpu.get_tpu_info().vmem_capacity_bytes)
    except Exception:
        return 64 * 1024 * 1024   # conservative fallback (v7x physical VMEM)


# ---------------------------------------------------------------------------
# Kernel 1: per-channel partial sum / sum-of-squares over row tiles.
# Accumulates into an (8, C_pad) f32 output block resident in VMEM across the
# reduction ("arbitrary") axis; pure VPU vreg adds per tile.  The 8->1 sublane
# reduce and all O(C) math happen in the plain-JAX epilogue.
# ---------------------------------------------------------------------------
def _make_stats_kernel(n_rows, tile_n, tiles_per_split, needs_mask):
    n_rows = int(n_rows)
    tile_n = int(tile_n)
    tiles_per_split = int(tiles_per_split)

    def kernel(x_ref, sum_ref, sq_ref):
        i = pl.program_id(1)

        @pl.when(i == 0)
        def _init():
            sum_ref[...] = jnp.zeros_like(sum_ref)
            sq_ref[...] = jnp.zeros_like(sq_ref)

        xt = x_ref[...].astype(jnp.float32)                  # (tile_n, C_pad)
        if needs_mask:
            c = pl.program_id(0)
            t = c * tiles_per_split + i                      # logical tile id
            rows = t * tile_n + jax.lax.broadcasted_iota(
                jnp.int32, xt.shape, 0)
            xt = jnp.where(rows < n_rows, xt, 0.0)           # zero OOB rows
        # vreg-aligned sublane split: (tile_n, C) -> (tile_n//8, 8, C); the
        # leading-axis sum is plain vreg adds (no cross-sublane XLU work).
        x3 = xt.reshape(tile_n // 8, 8, xt.shape[-1])
        sum_ref[...] += jnp.sum(x3, axis=0)
        sq_ref[...] += jnp.sum(x3 * x3, axis=0)

    return kernel


# ---------------------------------------------------------------------------
# Kernel 2: lane-dense normalize.  Reads the slab, applies y = x*scale+offset
# once per tile, and writes each irrep field's (tile_n, mul*d) slice directly
# to its own output buffer (dtype cast in-kernel).
# ---------------------------------------------------------------------------
def _make_norm_kernel(chan_offsets, widths):
    chan_offsets = tuple(int(c) for c in chan_offsets)
    widths = tuple(int(w) for w in widths)

    def kernel(x_ref, scale_ref, offset_ref, *o_refs):
        y = x_ref[...].astype(jnp.float32) * scale_ref[...] + offset_ref[...]
        for o_ref, co, w in zip(o_refs, chan_offsets, widths):
            o_ref[...] = y[:, co:co + w].astype(o_ref.dtype)

    return kernel


# ---------------------------------------------------------------------------
# Wrapper: mirrors batch_norm.forward for the default configuration
# ---------------------------------------------------------------------------
def batch_norm_forward(x, irreps, weight, bias, running_mean, running_var, *,
                       training=True, momentum=0.1, eps=1e-5, max_tile_n=None):
    """Returns (output_dict, new_running_mean, new_running_var)."""
    momentum = float(momentum)
    eps = float(eps)

    # ---- flatten every irrep field to (N, mul*d); static channel layout ----
    flat_fields, orig_shapes, orig_dtypes = [], [], []
    chan_offsets, widths = [], []
    N = None
    c_idx = 0
    for mul, l in irreps:
        d = 2 * l + 1
        field = x[l]
        orig_shapes.append(field.shape)
        orig_dtypes.append(field.dtype)
        f2 = field.reshape(-1, mul * d)                      # free reshape
        if N is None:
            N = f2.shape[0]
        assert f2.shape[0] == N, "all irrep fields must share batch*sample size"
        flat_fields.append(f2)
        chan_offsets.append(c_idx)
        widths.append(mul * d)
        c_idx += mul * d
    C_total = c_idx
    C_pad = _round_up(C_total, 128)
    num_features = sum(mul for mul, _ in irreps)
    num_scalar = sum(mul for mul, l in irreps if l == 0)

    wt = (jnp.ones((num_features,), jnp.float32) if weight is None
          else jnp.asarray(weight, jnp.float32))
    bs = (jnp.zeros((num_scalar,), jnp.float32) if bias is None
          else jnp.asarray(bias, jnp.float32))
    rm = jnp.asarray(running_mean, jnp.float32)
    rv = jnp.asarray(running_var, jnp.float32)

    # ---- lane-dense slab: ONE concatenate, channel padding folded in -------
    slab_dtype = jnp.result_type(*orig_dtypes)
    pieces = [f.astype(slab_dtype) for f in flat_fields]
    if C_pad > C_total:
        pieces.append(jnp.zeros((N, C_pad - C_total), slab_dtype))
    x_slab = jnp.concatenate(pieces, axis=1)                 # (N, C_pad)

    # ---- generation-aware, itemsize-aware tile sizing -----------------------
    phys_vmem = _vmem_capacity_bytes()
    vmem_cap = (96 << 20) if phys_vmem >= (100 << 20) else (48 << 20)
    in_row = C_pad * jnp.dtype(slab_dtype).itemsize
    # per-field output VMEM buffers are lane-padded to 128
    out_row = sum(_round_up(w, 128) * jnp.dtype(dt).itemsize
                  for w, dt in zip(widths, orig_dtypes))
    per_row = 2 * in_row + 2 * out_row                       # double-buffered
    tile_n = max(8, ((vmem_cap - (4 << 20)) // per_row) // 8 * 8)
    if max_tile_n is not None:
        tile_n = max(8, min(tile_n, (int(max_tile_n) // 8) * 8))
    tile_n = min(tile_n, _round_up(N, 8))
    n_tiles = -(-N // tile_n)
    est_bytes = tile_n * per_row + 4 * 8 * C_pad * 4 + 2 * C_pad * 4
    vmem_limit = int(min(vmem_cap, est_bytes + (16 << 20)))
    # TODO(synk): optionally sweep pipeline_mode=pl.Buffered(3) on the slab
    # input once tiles are large (budget above assumes 2 buffers).

    # ---- stats pass (training only): megacore-splittable partial sums ------
    if training:
        n_split = 2 if n_tiles >= 2 else 1
        tps = -(-n_tiles // n_split)
        needs_mask = (n_split * tps != n_tiles) or (N % tile_n != 0)
        if n_split * tps == n_tiles:
            x_map = lambda c, i: (c * tps + i, 0)
        else:  # clamp duplicate trailing tiles; the row mask zeroes them out
            x_map = lambda c, i: (jnp.minimum(c * tps + i, n_tiles - 1), 0)

        sum_part, sq_part = pl.pallas_call(
            _make_stats_kernel(N, tile_n, tps, needs_mask),
            grid=(n_split, tps),
            in_specs=[pl.BlockSpec((tile_n, C_pad), x_map)],
            out_specs=(pl.BlockSpec((8, C_pad), lambda c, i: (c, 0)),
                       pl.BlockSpec((8, C_pad), lambda c, i: (c, 0))),
            out_shape=(jax.ShapeDtypeStruct((n_split * 8, C_pad), jnp.float32),
                       jax.ShapeDtypeStruct((n_split * 8, C_pad), jnp.float32)),
            compiler_params=pltpu.CompilerParams(
                dimension_semantics=("parallel", "arbitrary"),
                vmem_limit_bytes=vmem_limit),
        )(x_slab)
        sum_c = jnp.sum(sum_part, axis=0)                    # (C_pad,)
        sq_c = jnp.sum(sq_part, axis=0)

    # ---- O(C) epilogue: per-feature norm, EMA, per-channel scale/offset ----
    scale_parts, offset_parts = [], []
    new_means, new_vars = [], []
    iw = ib = irm = irv = 0
    for (mul, l), co in zip(irreps, chan_offsets):
        d = 2 * l + 1
        if training:
            sq_f = sq_c[co:co + mul * d].reshape(mul, d).sum(axis=-1)
            if l == 0:
                mean_f = sum_c[co:co + mul] / float(N)
                # single-pass variance; TODO(synk): shifted two-pass accum if
                # inputs can have |mean| >> std (f32 cancellation).
                norm_f = sq_f / float(N) - mean_f * mean_f
                new_means.append((1.0 - momentum) * rm[irm:irm + mul]
                                 + momentum * mean_f)
                irm += mul
            else:
                mean_f = None
                norm_f = sq_f / float(N * d)
            new_vars.append((1.0 - momentum) * rv[irv:irv + mul]
                            + momentum * norm_f)
            irv += mul
        else:
            norm_f = rv[irv:irv + mul]
            irv += mul
            if l == 0:
                mean_f = rm[irm:irm + mul]
                irm += mul
            else:
                mean_f = None
        scale_f = jax.lax.rsqrt(norm_f + eps) * wt[iw:iw + mul]
        iw += mul
        if l == 0:
            off_f = bs[ib:ib + mul] - mean_f * scale_f
            ib += mul
        else:
            off_f = jnp.zeros((mul,), jnp.float32)
        scale_parts.append(jnp.repeat(scale_f, d))
        offset_parts.append(jnp.repeat(off_f, d))

    scale_c = jnp.concatenate(scale_parts).astype(jnp.float32)
    offset_c = jnp.concatenate(offset_parts).astype(jnp.float32)
    if C_pad > C_total:
        scale_c = jnp.pad(scale_c, (0, C_pad - C_total))
        offset_c = jnp.pad(offset_c, (0, C_pad - C_total))
    scale_c = scale_c.reshape(1, C_pad)
    offset_c = offset_c.reshape(1, C_pad)

    if training:
        new_running_mean = (jnp.concatenate(new_means) if new_means
                            else jnp.zeros((0,), jnp.float32))
        new_running_var = (jnp.concatenate(new_vars) if new_vars
                           else jnp.zeros((0,), jnp.float32))
    else:
        new_running_mean = rm
        new_running_var = rv

    # ---- normalize pass: per-irrep outputs, megacore-parallel row tiles ----
    out_shapes = tuple(jax.ShapeDtypeStruct((N, w), dt)
                       for w, dt in zip(widths, orig_dtypes))
    out_specs = tuple(pl.BlockSpec((tile_n, w), lambda i: (i, 0))
                      for w in widths)
    outs = pl.pallas_call(
        _make_norm_kernel(chan_offsets, widths),
        grid=(n_tiles,),
        in_specs=[pl.BlockSpec((tile_n, C_pad), lambda i: (i, 0)),
                  pl.BlockSpec((1, C_pad), lambda i: (0, 0)),
                  pl.BlockSpec((1, C_pad), lambda i: (0, 0))],
        out_specs=out_specs,
        out_shape=out_shapes,
        compiler_params=pltpu.CompilerParams(
            dimension_semantics=("parallel",),
            vmem_limit_bytes=vmem_limit),
    )(x_slab, scale_c, offset_c)
    if not isinstance(outs, (list, tuple)):
        outs = (outs,)

    output = {}
    for (mul, l), o, shp in zip(irreps, outs, orig_shapes):
        output[l] = o.reshape(shp)                           # free reshape
    return output, new_running_mean, new_running_var


# ---------------------------------------------------------------------------
# Pure-JAX references (direct transcriptions of the torch forward)
# ---------------------------------------------------------------------------
def batch_norm_ref_train(x, irreps, weight, bias, running_mean, running_var,
                         momentum=0.1, eps=1e-5):
    output = {}
    new_means, new_vars = [], []
    iw = ib = irm = irv = 0
    for mul, l in irreps:
        d = 2 * l + 1
        field = x[l]
        orig = field.shape
        B = orig[0]
        f = field.reshape(B, -1, mul, d).astype(jnp.float32)
        if l == 0:
            fm = f.mean(axis=(0, 1)).reshape(mul)
            new_means.append((1 - momentum) * running_mean[irm:irm + mul] + momentum * fm)
            irm += mul
            f = f - fm.reshape(1, 1, mul, 1)
        fn = (f ** 2).mean(axis=3).mean(axis=1).mean(axis=0)
        new_vars.append((1 - momentum) * running_var[irv:irv + mul] + momentum * fn)
        irv += mul
        scale = (fn + eps) ** -0.5 * weight[iw:iw + mul]
        iw += mul
        f = f * scale.reshape(1, 1, mul, 1)
        if l == 0:
            f = f + bias[ib:ib + mul].reshape(mul, 1)
            ib += mul
        output[l] = f.reshape(orig)
    return output, jnp.concatenate(new_means), jnp.concatenate(new_vars)


def batch_norm_ref_eval(x, irreps, weight, bias, running_mean, running_var, eps=1e-5):
    output = {}
    iw = ib = irm = irv = 0
    for mul, l in irreps:
        d = 2 * l + 1
        field = x[l]
        orig = field.shape
        B = orig[0]
        f = field.reshape(B, -1, mul, d).astype(jnp.float32)
        if l == 0:
            fm = running_mean[irm:irm + mul]
            irm += mul
            f = f - fm.reshape(1, 1, mul, 1)
        fn = running_var[irv:irv + mul]
        irv += mul
        scale = (fn + eps) ** -0.5 * weight[iw:iw + mul]
        iw += mul
        f = f * scale.reshape(1, 1, mul, 1)
        if l == 0:
            f = f + bias[ib:ib + mul].reshape(mul, 1)
            ib += mul
        output[l] = f.reshape(orig)
    return output


if __name__ == "__main__":
    # irreps_in = "4x0e + 3x1e + 2x2e" -> (mul, l) pairs, all parity +1
    irreps = [(4, 0), (3, 1), (2, 2)]
    B, S = 2, 8

    key = jax.random.PRNGKey(0)
    keys = jax.random.split(key, len(irreps))
    x = {
        l: (1.0 + l) * jax.random.normal(k, (B, S, mul, 2 * l + 1), dtype=jnp.float32)
           + 0.3 * l
        for k, (mul, l) in zip(keys, irreps)
    }

    num_features = sum(mul for mul, _ in irreps)              # 9
    num_scalar = sum(mul for mul, l in irreps if l == 0)      # 4

    weight = jnp.linspace(0.5, 1.5, num_features, dtype=jnp.float32)
    bias = jnp.linspace(-0.2, 0.2, num_scalar, dtype=jnp.float32)
    running_mean = jnp.zeros((num_scalar,), jnp.float32)
    running_var = jnp.ones((num_features,), jnp.float32)

    # ---- training mode ----
    out, new_rm, new_rv = batch_norm_forward(
        x, irreps, weight, bias, running_mean, running_var,
        training=True, momentum=0.1, eps=1e-5)
    jax.block_until_ready((out, new_rm, new_rv))

    ref_out, ref_rm, ref_rv = batch_norm_ref_train(
        x, irreps, weight, bias, running_mean, running_var, momentum=0.1, eps=1e-5)
    for l in ref_out:
        np.testing.assert_allclose(np.asarray(out[l]), np.asarray(ref_out[l]),
                                   rtol=1e-5, atol=1e-5)
    np.testing.assert_allclose(np.asarray(new_rm), np.asarray(ref_rm), rtol=1e-5, atol=1e-6)
    np.testing.assert_allclose(np.asarray(new_rv), np.asarray(ref_rv), rtol=1e-5, atol=1e-6)

    # ---- training mode, multi-tile + partial-tile path ----
    # (exercises the row mask, accumulation across the "arbitrary" axis and
    #  the ("parallel","arbitrary") megacore split of the stats pass)
    B2, S2 = 2, 13
    keys2 = jax.random.split(jax.random.PRNGKey(1), len(irreps))
    x2 = {
        l: (1.0 + l) * jax.random.normal(k, (B2, S2, mul, 2 * l + 1), dtype=jnp.float32)
           - 0.1 * l
        for k, (mul, l) in zip(keys2, irreps)
    }
    out2, rm2n, rv2n = batch_norm_forward(
        x2, irreps, weight, bias, running_mean, running_var,
        training=True, momentum=0.1, eps=1e-5, max_tile_n=8)
    jax.block_until_ready((out2, rm2n, rv2n))
    ref_out2, ref_rm2, ref_rv2 = batch_norm_ref_train(
        x2, irreps, weight, bias, running_mean, running_var, momentum=0.1, eps=1e-5)
    for l in ref_out2:
        np.testing.assert_allclose(np.asarray(out2[l]), np.asarray(ref_out2[l]),
                                   rtol=1e-5, atol=1e-5)
    np.testing.assert_allclose(np.asarray(rm2n), np.asarray(ref_rm2), rtol=1e-5, atol=1e-6)
    np.testing.assert_allclose(np.asarray(rv2n), np.asarray(ref_rv2), rtol=1e-5, atol=1e-6)

    # ---- eval mode (running buffers) ----
    rm_e = 0.05 * jnp.arange(num_scalar, dtype=jnp.float32)
    rv_e = 1.0 + 0.1 * jnp.arange(num_features, dtype=jnp.float32)
    out_e, keep_rm, keep_rv = batch_norm_forward(
        x, irreps, weight, bias, rm_e, rv_e, training=False, momentum=0.1, eps=1e-5)
    jax.block_until_ready(out_e)
    ref_e = batch_norm_ref_eval(x, irreps, weight, bias, rm_e, rv_e, eps=1e-5)
    for l in ref_e:
        np.testing.assert_allclose(np.asarray(out_e[l]), np.asarray(ref_e[l]),
                                   rtol=1e-5, atol=1e-5)
    np.testing.assert_allclose(np.asarray(keep_rm), np.asarray(rm_e), rtol=0, atol=0)
    np.testing.assert_allclose(np.asarray(keep_rv), np.asarray(rv_e), rtol=0, atol=0)

    print("KERNEL_OK")
</pallas_src>

<mosaic_0001>
module attributes {stable_mosaic.version = 11 : i64} {
  func.func @kernel(%arg0: i32, %arg1: i32, %arg2: memref<16x128xf32, #tpu.memory_space<vmem>>, %arg3: memref<8x128xf32, #tpu.memory_space<vmem>>, %arg4: memref<8x128xf32, #tpu.memory_space<vmem>>) attributes {dimension_semantics = [#tpu.dimension_semantics<parallel>, #tpu.dimension_semantics<arbitrary>], iteration_bounds = array<i64: 1, 1>, scalar_prefetch = 0 : i64, scratch_operands = 0 : i64, tpu.core_type = #tpu.core_type<tc>, window_params = [{transform_indices = @transform_0, window_bounds = array<i64: 16, 128>}, {transform_indices = @transform_1, window_bounds = array<i64: 8, 128>}, {transform_indices = @transform_2, window_bounds = array<i64: 8, 128>}]} {
    %c0_i32 = arith.constant 0 : i32
    %0 = arith.cmpi eq, %arg1, %c0_i32 : i32
    %1 = arith.extui %0 : i1 to i32
    %c0_i32_0 = arith.constant 0 : i32
    %2 = arith.cmpi ne, %1, %c0_i32_0 : i32
    scf.if %2 {
      %cst_11 = arith.constant 0.000000e+00 : f32
      %14 = vector.broadcast %cst_11 : f32 to vector<8x128xf32>
      %c0_12 = arith.constant 0 : index
      %c0_13 = arith.constant 0 : index
      %15 = vector.load %arg3[%c0_12, %c0_13] : memref<8x128xf32, #tpu.memory_space<vmem>>, vector<8x128xf32>
      tpu.vector_store %arg3[%c0_12, %c0_13], %14 {strides = array<i32>} : memref<8x128xf32, #tpu.memory_space<vmem>>, vector<8x128xf32>,
      %cst_14 = arith.constant 0.000000e+00 : f32
      %16 = vector.broadcast %cst_14 : f32 to vector<8x128xf32>
      %c0_15 = arith.constant 0 : index
      %c0_16 = arith.constant 0 : index
      %17 = vector.load %arg4[%c0_15, %c0_16] : memref<8x128xf32, #tpu.memory_space<vmem>>, vector<8x128xf32>
      tpu.vector_store %arg4[%c0_15, %c0_16], %16 {strides = array<i32>} : memref<8x128xf32, #tpu.memory_space<vmem>>, vector<8x128xf32>,
    } else {
    }
    %c0 = arith.constant 0 : index
    %c0_1 = arith.constant 0 : index
    %3 = vector.load %arg2[%c0, %c0_1] : memref<16x128xf32, #tpu.memory_space<vmem>>, vector<16x128xf32>
    %4 = vector.shape_cast %3 : vector<16x128xf32> to vector<2x8x128xf32>
    %c0_2 = arith.constant 0 : index
    %c0_3 = arith.constant 0 : index
    %5 = vector.load %arg3[%c0_2, %c0_3] : memref<8x128xf32, #tpu.memory_space<vmem>>, vector<8x128xf32>
    %cst = arith.constant dense<0.000000e+00> : vector<8x128xf32>
    %6 = vector.multi_reduction <add>, %4, %cst [0] : vector<2x8x128xf32> to vector<8x128xf32>
    %7 = arith.addf %5, %6 : vector<8x128xf32>
    %c0_4 = arith.constant 0 : index
    %c0_5 = arith.constant 0 : index
    %8 = vector.load %arg3[%c0_4, %c0_5] : memref<8x128xf32, #tpu.memory_space<vmem>>, vector<8x128xf32>
    tpu.vector_store %arg3[%c0_4, %c0_5], %7 {strides = array<i32>} : memref<8x128xf32, #tpu.memory_space<vmem>>, vector<8x128xf32>,
    %c0_6 = arith.constant 0 : index
    %c0_7 = arith.constant 0 : index
    %9 = vector.load %arg4[%c0_6, %c0_7] : memref<8x128xf32, #tpu.memory_space<vmem>>, vector<8x128xf32>
    %10 = arith.mulf %4, %4 : vector<2x8x128xf32>
    %cst_8 = arith.constant dense<0.000000e+00> : vector<8x128xf32>
    %11 = vector.multi_reduction <add>, %10, %cst_8 [0] : vector<2x8x128xf32> to vector<8x128xf32>
    %12 = arith.addf %9, %11 : vector<8x128xf32>
    %c0_9 = arith.constant 0 : index
    %c0_10 = arith.constant 0 : index
    %13 = vector.load %arg4[%c0_9, %c0_10] : memref<8x128xf32, #tpu.memory_space<vmem>>, vector<8x128xf32>
    tpu.vector_store %arg4[%c0_9, %c0_10], %12 {strides = array<i32>} : memref<8x128xf32, #tpu.memory_space<vmem>>, vector<8x128xf32>,
    return
  }
  func.func @transform_0(%arg0: i32, %arg1: i32) -> (i32, i32) {
    %c1_i32 = arith.constant 1 : i32
    %0 = arith.muli %arg0, %c1_i32 : i32
    %1 = arith.addi %0, %arg1 : i32
    %c0_i32 = arith.constant 0 : i32
    %c0_i32_0 = arith.constant 0 : i32
    return %1, %c0_i32 : i32, i32
  }
  func.func @transform_1(%arg0: i32, %arg1: i32) -> (i32, i32) {
    %c0_i32 = arith.constant 0 : i32
    %c0_i32_0 = arith.constant 0 : i32
    return %arg0, %c0_i32 : i32, i32
  }
  func.func @transform_2(%arg0: i32, %arg1: i32) -> (i32, i32) {
    %c0_i32 = arith.constant 0 : i32
    %c0_i32_0 = arith.constant 0 : i32
    return %arg0, %c0_i32 : i32, i32
  }
}

</mosaic_0001>

<llo_original>
// kernel: tpu_custom_call.1
$region0: #{tpu_custom_call.1}
  #allocation0 [shape = 'u32[]', space=smem, size = 0x4, offset = 0x4, fixed_abs, tag = 'smem constant byte address 0x4 - core index']
  #allocation1 [shape = 'u32[72,128]{1,0:T(1,128)}', space=vmem, size = 0x9000, scoped, tag = 'internal scratch']
  %s0 = inlined_call_operand.hbm [shape: f32[16,128], index: 0, kind: input, shape index: {}]
  %s1 = inlined_call_operand.hbm [shape: f32[8,128], index: 1, kind: output, shape index: {0}]
  %s2 = inlined_call_operand.hbm [shape: f32[8,128], index: 2, kind: output, shape index: {1}]
  %3 = xla_tuple %s1, %s2
  %s4 = sld [smem:[#allocation0]]
  $region30: #{tpu_custom_call.1} parent=0
    _
  %s6 = ssub.s32 1, %s4
  %s7 = scalar_select 0, %s6, %s4
  $region1: #{tpu_custom_call.1} parent=0
    #allocation2 [shape = 'u8[8192]{0}', space=vmem, size = 0x2000, scoped, tag = 'input window, operand 0, single buffered']
    #allocation3 [shape = 's32[1]{0}', space=sflag, size = 0x4, scoped, tag = 'scoped memory for tpu_custom_call.1']
    #allocation4 [shape = 's32[1]{0}', space=sflag, size = 0x4, scoped, tag = 'scoped memory for tpu_custom_call.1']
    #allocation5 [shape = 'u8[4096]{0}', space=vmem, size = 0x1000, scoped, tag = 'output window, operand 0, single buffered']
    #allocation6 [shape = 'u8[4096]{0}', space=vmem, size = 0x1000, scoped, tag = 'output window, operand 1, single buffered']
    #allocation7 [shape = 's32[1]{0}', space=sflag, size = 0x4, scoped, tag = 'scoped memory for tpu_custom_call.1']
    %8 = vsyncpa [#allocation3], 0
    %9 = vsyncpa [#allocation4], 0
    %10 = vsyncpa [#allocation7], 0
    // Predicated region
    $region2: #{tpu_custom_call.1} parent=1 // pred_check
      _
    $region3: #{tpu_custom_call.1} parent=1 // pred_check_branch
      %12 = sbr.rel (0) target = $region5
    $region4: #{tpu_custom_call.1} parent=1 // pred_region
      %s13 = sadd.s32 0, 0
      %s14 = smul.u32 2, %s13
      %16 = vsyncadd [#allocation3], 0
      %s17 = smul.addr %s14, 8
      %s18 = scalar_lea.hbm %s0, %s17
      %s19 = sshll.u32 %s18, 4
      %s20 = int_to_ptr.hbm [resolvable:$true] %s19
      %s21 = sshll.u32 [#allocation2], 4
      %s22 = int_to_ptr.vmem [resolvable:$true] %s21
      %27 = dma.hbm_to_vmem [thread:$0]  %s20, 256, %s22, [#allocation3], 128, 128, 8
    $region5: #{tpu_custom_call.1} parent=1 // pred_fallthru
      _
    // Predicated region
    $region6: #{tpu_custom_call.1} parent=1 // pred_check
      _
    $region7: #{tpu_custom_call.1} parent=1 // pred_check_branch
      %29 = sbr.rel (0) target = $region9
    $region8: #{tpu_custom_call.1} parent=1 // pred_region
      %31 = dma.done [#allocation3], 256
    $region9: #{tpu_custom_call.1} parent=1 // pred_fallthru
      _
    %s32 = sadd.s32 0, 0
    %s33 = smul.u32 2, %s32
    %p34 = scmp.eq.s32.totalorder 0, 0
    // Predicated region
    $region10: #{tpu_custom_call.1} parent=1 // pred_check
      %p35 = pneg %p34
    $region11: #{tpu_custom_call.1} parent=1 // pred_check_branch
      %37 = sbr.rel (%p35) target = $region13
    $region12: #{tpu_custom_call.1} parent=1 // pred_region
      %38 = vst [vmem:[#allocation5] sm:$0xff] 0.0
      %39 = vst [vmem:[#allocation6] sm:$0xff] 0.0
    $region13: #{tpu_custom_call.1} parent=1 // pred_fallthru
      _
    %v40 = vld [vmem:[#allocation2] sm:$0xff]
    %v41 = vld [vmem:[#allocation2 + $0x8] sm:$0xff]
    %v42 = vld [vmem:[#allocation5] sm:$0xff]
    %v43 = vadd.f32 %v40, %v41
    %v44 = vadd.f32 %v42, %v43
    %45 = vst [vmem:[#allocation5] sm:$0xff] %v44
    %v46 = vld [vmem:[#allocation6] sm:$0xff]
    %v47 = vmul.f32 %v40, %v40
    %v48 = vmul.f32 %v41, %v41
    %v49 = vadd.f32 %v47, %v48
    %v50 = vadd.f32 %v46, %v49
    %51 = vst [vmem:[#allocation6] sm:$0xff] %v50
    // Predicated region
    $region14: #{tpu_custom_call.1} parent=1 // pred_check
      _
    $region15: #{tpu_custom_call.1} parent=1 // pred_check_branch
      %53 = sbr.rel (0) target = $region17
    $region16: #{tpu_custom_call.1} parent=1 // pred_region
      %55 = vsyncadd [#allocation4], 0
      %s57 = sshll.u32 [#allocation5], 4
      %s58 = int_to_ptr.vmem [resolvable:$true] %s57
      %s59 = sshll.u32 %s1, 4
      %s60 = int_to_ptr.hbm [resolvable:$true] %s59
      %62 = dma.vmem_to_hbm [thread:$0]  %s58, 128, %s60, [#allocation4]
    $region17: #{tpu_custom_call.1} parent=1 // pred_fallthru
      _
    // Predicated region
    $region18: #{tpu_custom_call.1} parent=1 // pred_check
      _
    $region19: #{tpu_custom_call.1} parent=1 // pred_check_branch
      %64 = sbr.rel (0) target = $region21
    $region20: #{tpu_custom_call.1} parent=1 // pred_region
      %66 = vsyncadd [#allocation7], 0
      %s68 = sshll.u32 [#allocation6], 4
      %s69 = int_to_ptr.vmem [resolvable:$true] %s68
      %s70 = sshll.u32 %s2, 4
      %s71 = int_to_ptr.hbm [resolvable:$true] %s70
      %73 = dma.vmem_to_hbm [thread:$0]  %s69, 128, %s71, [#allocation7]
    $region21: #{tpu_custom_call.1} parent=1 // pred_fallthru
      _
    // Predicated region
    $region22: #{tpu_custom_call.1} parent=1 // pred_check
      _
    $region23: #{tpu_custom_call.1} parent=1 // pred_check_branch
      %75 = sbr.rel (0) target = $region25
    $region24: #{tpu_custom_call.1} parent=1 // pred_region
      %77 = dma.done [#allocation4], 128
    $region25: #{tpu_custom_call.1} parent=1 // pred_fallthru
      _
    // Predicated region
    $region26: #{tpu_custom_call.1} parent=1 // pred_check
      _
    $region27: #{tpu_custom_call.1} parent=1 // pred_check_branch
      %79 = sbr.rel (0) target = $region29
    $region28: #{tpu_custom_call.1} parent=1 // pred_region
      %81 = dma.done [#allocation7], 128
    $region29: #{tpu_custom_call.1} parent=1 // pred_fallthru
      _
    %82 = vsyncpa [#allocation3], 1
    %83 = vsyncpa [#allocation4], 1
    %84 = vsyncpa [#allocation7], 1

</llo_original>
